<compile_context>
chip_gen: v7x
topology: tpu7x:2x2x1
jax: 0.10.0
libtpu: 0.0.40
codegen_flags: <defaults>
</compile_context>

<pallas_src>
import functools

import jax
import jax.numpy as jnp
from jax import lax
from jax.experimental import pallas as pl
from jax.experimental.pallas import tpu as pltpu

# Tap order matches the host-side weight packing: tap = ky*3 + kx, dy = ky-1, dx = kx-1.
_TAPS = tuple((dy, dx) for dy in (-1, 0, 1) for dx in (-1, 0, 1))


def _round_up(x, m):
    return (x + m - 1) // m * m


def _double_conv_kernel(x_ref, w1_ref, w2_ref, o_ref, *, H, W):
    # x_ref : (Cp1, S_blk)   bf16  input, channels zero-padded to Cp1, batch on lanes
    # w1_ref: (Cp2, 9*Cp1)   bf16  conv1 weights, K index = tap*Cp1 + cin
    # w2_ref: (Cout, 9*Cp2)  bf16  conv2 weights, K index = tap*Cp2 + cmid
    # o_ref : (Cout, S_blk)
    S_img = H * W
    S_blk = x_ref.shape[-1]

    def _mod(a, n):  # cheap path when n is a power of two (no VPU integer mod)
        return (a & (n - 1)) if (n & (n - 1)) == 0 else lax.rem(a, n)

    # --- Boundary masks: hoisted, built once, reused by both convs. ---
    pos = lax.broadcasted_iota(jnp.int32, (1, S_blk), 1)
    p_img = _mod(pos, S_img)            # position within its own image
    col = _mod(pos, W)                  # column within its own row
    top_ok = p_img >= W                 # dy = -1
    bot_ok = p_img < (H - 1) * W        # dy = +1
    left_ok = col >= 1                  # dx = -1
    right_ok = col <= W - 2             # dx = +1

    def tap_mask(dy, dx):
        m = None
        if dy == -1:
            m = top_ok
        elif dy == 1:
            m = bot_ok
        if dx == -1:
            m = left_ok if m is None else jnp.logical_and(m, left_ok)
        elif dx == 1:
            m = right_ok if m is None else jnp.logical_and(m, right_ok)
        return m

    masks = [tap_mask(dy, dx) for dy, dx in _TAPS]

    def conv3x3(inp_f32, w_ref):
        # Build one stacked (9*Cp, S_blk) operand: the 9 rolled+masked taps are
        # concatenated along the sublane/contraction axis.  Each tap block has
        # Cp % 8 == 0 rows (f32 tile-aligned), so the concat is pure layout.
        taps = []
        for t, (dy, dx) in enumerate(_TAPS):
            delta = dy * W + dx          # tap reads inp[:, p + delta]
            if delta == 0:
                v = inp_f32
            else:
                v = pltpu.roll(inp_f32, shift=(-delta) % S_blk, axis=1)
            if masks[t] is not None:     # zero taps outside the zero-padded image
                v = jnp.where(masks[t], v, 0.0)
            taps.append(v)
        stacked = jnp.concatenate(taps, axis=0).astype(jnp.bfloat16)
        # One MXU dot per conv (K = 9*Cp), f32 accumulation in the systolic array.
        return jnp.dot(w_ref[...], stacked, preferred_element_type=jnp.float32)

    x = x_ref[...].astype(jnp.float32)                 # rolls/masks in f32 (v5e VPU)
    mid = jnp.maximum(conv3x3(x, w1_ref), 0.0)         # (Cp2, S_blk); padded rows stay 0
    out = jnp.maximum(conv3x3(mid, w2_ref), 0.0)       # (Cout, S_blk)
    o_ref[...] = out.astype(o_ref.dtype)


def double_conv(x_nchw, w1_oihw, w2_oihw, *, num_blocks=1):
    """DoubleConv forward.  x: (N, Cin, H, W); weights in PyTorch OIHW layout.

    num_blocks: grid steps over the batch.  1 is best on single-TC v5e/v6e;
    use 2 on dual-TC v7x so both cores get a shard.
    """
    N, Cin, H, W = x_nchw.shape
    Cmid = w1_oihw.shape[0]
    Cout = w2_oihw.shape[0]
    assert w1_oihw.shape == (Cmid, Cin, 3, 3)
    assert w2_oihw.shape == (Cout, Cmid, 3, 3)
    assert N % num_blocks == 0

    S_img = H * W
    S_tot = N * S_img
    S_blk = (N // num_blocks) * S_img
    Cp1 = _round_up(Cin, 8)
    Cp2 = _round_up(Cmid, 8)

    # Input: NCHW -> (Cin, N*H*W) so batch sits on the lane axis; zero-pad channels
    # to a sublane multiple; ship bf16 (halves DMA; MXU operands are bf16 anyway).
    x_flat = jnp.transpose(x_nchw, (1, 0, 2, 3)).reshape(Cin, S_tot)
    x_flat = jnp.pad(x_flat, ((0, Cp1 - Cin), (0, 0))).astype(jnp.bfloat16)

    # Weights: OIHW -> lane-dense (Co_pad, 9*Ci_pad) with K index = tap*Ci_pad + ci.
    # Conv1's output dim is padded to Cp2 so the intermediate is already sublane-padded.
    def pack_w(w, cin, cin_pad, cout, cout_pad):
        w = jnp.transpose(w, (0, 2, 3, 1)).reshape(cout, 9, cin)        # (O, tap, I)
        w = jnp.pad(w, ((0, cout_pad - cout), (0, 0), (0, cin_pad - cin)))
        return w.reshape(cout_pad, 9 * cin_pad).astype(jnp.bfloat16)

    w1 = pack_w(w1_oihw, Cin, Cp1, Cmid, Cp2)      # (Cp2, 9*Cp1)
    w2 = pack_w(w2_oihw, Cmid, Cp2, Cout, Cout)    # (Cout, 9*Cp2)

    kernel = functools.partial(_double_conv_kernel, H=H, W=W)

    out_flat = pl.pallas_call(
        kernel,
        out_shape=jax.ShapeDtypeStruct((Cout, S_tot), x_nchw.dtype),
        grid=(num_blocks,),
        in_specs=[
            pl.BlockSpec((Cp1, S_blk), lambda i: (0, i)),          # x (batch shard on lanes)
            pl.BlockSpec((Cp2, 9 * Cp1), lambda i: (0, 0)),        # w1 (grid-invariant)
            pl.BlockSpec((Cout, 9 * Cp2), lambda i: (0, 0)),       # w2 (grid-invariant)
        ],
        out_specs=pl.BlockSpec((Cout, S_blk), lambda i: (0, i)),
        compiler_params=pltpu.CompilerParams(
            dimension_semantics=("parallel",)),
    )(x_flat, w1, w2)

    # (Cout, N*H*W) -> NCHW (tiny transpose on host side).
    return jnp.transpose(out_flat.reshape(Cout, N, H, W), (1, 0, 2, 3))


def _reference(x_nchw, w1_oihw, w2_oihw):
    """Pure-JAX f32 reference (lax conv) for correctness checking."""
    dn = lax.conv_dimension_numbers(x_nchw.shape, w1_oihw.shape,
                                    ("NCHW", "OIHW", "NCHW"))
    h = lax.conv_general_dilated(x_nchw, w1_oihw, (1, 1), "SAME",
                                 dimension_numbers=dn)
    h = jnp.maximum(h, 0.0)
    dn2 = lax.conv_dimension_numbers(h.shape, w2_oihw.shape,
                                     ("NCHW", "OIHW", "NCHW"))
    y = lax.conv_general_dilated(h, w2_oihw, (1, 1), "SAME",
                                 dimension_numbers=dn2)
    return jnp.maximum(y, 0.0)


if __name__ == "__main__":
    # Small shapes consistent with the module: in_ch=4, out_ch=8 (mid_ch=out_ch).
    N, Cin, Cmid, Cout, H, W = 2, 4, 8, 8, 16, 16

    key = jax.random.PRNGKey(0)
    kx, kw1, kw2 = jax.random.split(key, 3)
    x = jax.random.normal(kx, (N, Cin, H, W), dtype=jnp.float32)
    # PyTorch OIHW weight shapes: (out, in, 3, 3).
    w1 = jax.random.normal(kw1, (Cmid, Cin, 3, 3), dtype=jnp.float32) * 0.1
    w2 = jax.random.normal(kw2, (Cout, Cmid, 3, 3), dtype=jnp.float32) * 0.1

    out = jax.block_until_ready(double_conv(x, w1, w2))
    ref = jax.block_until_ready(_reference(x, w1, w2))

    assert out.shape == (N, Cout, H, W)
    # bf16 MXU operands vs. an f32 reference -> tolerance loosened accordingly.
    assert jnp.allclose(out, ref, rtol=3e-2, atol=3e-2)

    print("KERNEL_OK")
</pallas_src>

<mosaic_0001>
module attributes {stable_mosaic.version = 11 : i64} {
  func.func @_double_conv_kernel(%arg0: i32, %arg1: memref<8x512xbf16, #tpu.memory_space<vmem>>, %arg2: memref<8x72xbf16, #tpu.memory_space<vmem>>, %arg3: memref<8x72xbf16, #tpu.memory_space<vmem>>, %arg4: memref<8x512xf32, #tpu.memory_space<vmem>>) attributes {dimension_semantics = [#tpu.dimension_semantics<parallel>], iteration_bounds = array<i64: 1>, scalar_prefetch = 0 : i64, scratch_operands = 0 : i64, tpu.core_type = #tpu.core_type<tc>, window_params = [{transform_indices = @transform_0, window_bounds = array<i64: 8, 512>}, {pipeline_mode = #tpu.pipeline_mode<synchronous>, transform_indices = @transform_1, window_bounds = array<i64: 8, 72>}, {pipeline_mode = #tpu.pipeline_mode<synchronous>, transform_indices = @transform_2, window_bounds = array<i64: 8, 72>}, {transform_indices = @transform_3, window_bounds = array<i64: 8, 512>}]} {
    %0 = tpu.iota {dimensions = array<i32: 1>} : vector<1x512xi32>
    %c255_i32 = arith.constant 255 : i32
    %1 = vector.broadcast %c255_i32 : i32 to vector<1x512xi32>
    %2 = arith.andi %0, %1 : vector<1x512xi32>
    %c15_i32 = arith.constant 15 : i32
    %3 = vector.broadcast %c15_i32 : i32 to vector<1x512xi32>
    %4 = arith.andi %0, %3 : vector<1x512xi32>
    %c16_i32 = arith.constant 16 : i32
    %5 = vector.broadcast %c16_i32 : i32 to vector<1x512xi32>
    %6 = arith.cmpi sge, %2, %5 : vector<1x512xi32>
    %c240_i32 = arith.constant 240 : i32
    %7 = vector.broadcast %c240_i32 : i32 to vector<1x512xi32>
    %8 = arith.cmpi slt, %2, %7 : vector<1x512xi32>
    %c1_i32 = arith.constant 1 : i32
    %9 = vector.broadcast %c1_i32 : i32 to vector<1x512xi32>
    %10 = arith.cmpi sge, %4, %9 : vector<1x512xi32>
    %c14_i32 = arith.constant 14 : i32
    %11 = vector.broadcast %c14_i32 : i32 to vector<1x512xi32>
    %12 = arith.cmpi sle, %4, %11 : vector<1x512xi32>
    %13 = arith.andi %6, %10 : vector<1x512xi1>
    %14 = arith.andi %6, %12 : vector<1x512xi1>
    %15 = arith.andi %8, %10 : vector<1x512xi1>
    %16 = arith.andi %8, %12 : vector<1x512xi1>
    %c0 = arith.constant 0 : index
    %c0_0 = arith.constant 0 : index
    %17 = vector.load %arg1[%c0, %c0_0] : memref<8x512xbf16, #tpu.memory_space<vmem>>, vector<8x512xbf16>
    %18 = arith.extf %17 : vector<8x512xbf16> to vector<8x512xf32>
    %c17_i32 = arith.constant 17 : i32
    %19 = tpu.dynamic_rotate %18 by %c17_i32 dim 1 : vector<8x512xf32>, i32 -> vector<8x512xf32>
    %cst = arith.constant 0.000000e+00 : f32
    %20 = vector.shape_cast %13 : vector<1x512xi1> to vector<1x512xi1>
    %21 = vector.broadcast %20 : vector<1x512xi1> to vector<8x512xi1>
    %22 = vector.broadcast %cst : f32 to vector<8x512xf32>
    %23 = arith.select %21, %19, %22 : vector<8x512xi1>, vector<8x512xf32>
    %c16_i32_1 = arith.constant 16 : i32
    %24 = tpu.dynamic_rotate %18 by %c16_i32_1 dim 1 : vector<8x512xf32>, i32 -> vector<8x512xf32>
    %cst_2 = arith.constant 0.000000e+00 : f32
    %25 = vector.shape_cast %6 : vector<1x512xi1> to vector<1x512xi1>
    %26 = vector.broadcast %25 : vector<1x512xi1> to vector<8x512xi1>
    %27 = vector.broadcast %cst_2 : f32 to vector<8x512xf32>
    %28 = arith.select %26, %24, %27 : vector<8x512xi1>, vector<8x512xf32>
    %c15_i32_3 = arith.constant 15 : i32
    %29 = tpu.dynamic_rotate %18 by %c15_i32_3 dim 1 : vector<8x512xf32>, i32 -> vector<8x512xf32>
    %cst_4 = arith.constant 0.000000e+00 : f32
    %30 = vector.shape_cast %14 : vector<1x512xi1> to vector<1x512xi1>
    %31 = vector.broadcast %30 : vector<1x512xi1> to vector<8x512xi1>
    %32 = vector.broadcast %cst_4 : f32 to vector<8x512xf32>
    %33 = arith.select %31, %29, %32 : vector<8x512xi1>, vector<8x512xf32>
    %c1_i32_5 = arith.constant 1 : i32
    %34 = tpu.dynamic_rotate %18 by %c1_i32_5 dim 1 : vector<8x512xf32>, i32 -> vector<8x512xf32>
    %cst_6 = arith.constant 0.000000e+00 : f32
    %35 = vector.shape_cast %10 : vector<1x512xi1> to vector<1x512xi1>
    %36 = vector.broadcast %35 : vector<1x512xi1> to vector<8x512xi1>
    %37 = vector.broadcast %cst_6 : f32 to vector<8x512xf32>
    %38 = arith.select %36, %34, %37 : vector<8x512xi1>, vector<8x512xf32>
    %c511_i32 = arith.constant 511 : i32
    %39 = tpu.dynamic_rotate %18 by %c511_i32 dim 1 : vector<8x512xf32>, i32 -> vector<8x512xf32>
    %cst_7 = arith.constant 0.000000e+00 : f32
    %40 = vector.shape_cast %12 : vector<1x512xi1> to vector<1x512xi1>
    %41 = vector.broadcast %40 : vector<1x512xi1> to vector<8x512xi1>
    %42 = vector.broadcast %cst_7 : f32 to vector<8x512xf32>
    %43 = arith.select %41, %39, %42 : vector<8x512xi1>, vector<8x512xf32>
    %c497_i32 = arith.constant 497 : i32
    %44 = tpu.dynamic_rotate %18 by %c497_i32 dim 1 : vector<8x512xf32>, i32 -> vector<8x512xf32>
    %cst_8 = arith.constant 0.000000e+00 : f32
    %45 = vector.shape_cast %15 : vector<1x512xi1> to vector<1x512xi1>
    %46 = vector.broadcast %45 : vector<1x512xi1> to vector<8x512xi1>
    %47 = vector.broadcast %cst_8 : f32 to vector<8x512xf32>
    %48 = arith.select %46, %44, %47 : vector<8x512xi1>, vector<8x512xf32>
    %c496_i32 = arith.constant 496 : i32
    %49 = tpu.dynamic_rotate %18 by %c496_i32 dim 1 : vector<8x512xf32>, i32 -> vector<8x512xf32>
    %cst_9 = arith.constant 0.000000e+00 : f32
    %50 = vector.shape_cast %8 : vector<1x512xi1> to vector<1x512xi1>
    %51 = vector.broadcast %50 : vector<1x512xi1> to vector<8x512xi1>
    %52 = vector.broadcast %cst_9 : f32 to vector<8x512xf32>
    %53 = arith.select %51, %49, %52 : vector<8x512xi1>, vector<8x512xf32>
    %c495_i32 = arith.constant 495 : i32
    %54 = tpu.dynamic_rotate %18 by %c495_i32 dim 1 : vector<8x512xf32>, i32 -> vector<8x512xf32>
    %cst_10 = arith.constant 0.000000e+00 : f32
    %55 = vector.shape_cast %16 : vector<1x512xi1> to vector<1x512xi1>
    %56 = vector.broadcast %55 : vector<1x512xi1> to vector<8x512xi1>
    %57 = vector.broadcast %cst_10 : f32 to vector<8x512xf32>
    %58 = arith.select %56, %54, %57 : vector<8x512xi1>, vector<8x512xf32>
    %59 = tpu.concatenate %23, %28, %33, %38, %18, %43, %48, %53, %58 in 0 : vector<8x512xf32>, vector<8x512xf32>, vector<8x512xf32>, vector<8x512xf32>, vector<8x512xf32>, vector<8x512xf32>, vector<8x512xf32>, vector<8x512xf32>, vector<8x512xf32> -> vector<72x512xf32>
    %60 = arith.truncf %59 : vector<72x512xf32> to vector<72x512xbf16>
    %c0_11 = arith.constant 0 : index
    %c0_12 = arith.constant 0 : index
    %61 = vector.load %arg2[%c0_11, %c0_12] : memref<8x72xbf16, #tpu.memory_space<vmem>>, vector<8x72xbf16>
    %cst_13 = arith.constant dense<0.000000e+00> : vector<8x512xf32>
    %62 = tpu.matmul %61, %60, %cst_13 {dimension_numbers = #tpu.dot_dimension_numbers<[1], [0], [0], [1], [0, 0, 1, 1], [], []>} : vector<8x72xbf16>, vector<72x512xbf16>, vector<8x512xf32> -> vector<8x512xf32>
    %cst_14 = arith.constant 0.000000e+00 : f32
    %63 = vector.broadcast %cst_14 : f32 to vector<8x512xf32>
    %64 = arith.maximumf %62, %63 : vector<8x512xf32>
    %c17_i32_15 = arith.constant 17 : i32
    %65 = tpu.dynamic_rotate %64 by %c17_i32_15 dim 1 : vector<8x512xf32>, i32 -> vector<8x512xf32>
    %cst_16 = arith.constant 0.000000e+00 : f32
    %66 = vector.shape_cast %13 : vector<1x512xi1> to vector<1x512xi1>
    %67 = vector.broadcast %66 : vector<1x512xi1> to vector<8x512xi1>
    %68 = vector.broadcast %cst_16 : f32 to vector<8x512xf32>
    %69 = arith.select %67, %65, %68 : vector<8x512xi1>, vector<8x512xf32>
    %c16_i32_17 = arith.constant 16 : i32
    %70 = tpu.dynamic_rotate %64 by %c16_i32_17 dim 1 : vector<8x512xf32>, i32 -> vector<8x512xf32>
    %cst_18 = arith.constant 0.000000e+00 : f32
    %71 = vector.shape_cast %6 : vector<1x512xi1> to vector<1x512xi1>
    %72 = vector.broadcast %71 : vector<1x512xi1> to vector<8x512xi1>
    %73 = vector.broadcast %cst_18 : f32 to vector<8x512xf32>
    %74 = arith.select %72, %70, %73 : vector<8x512xi1>, vector<8x512xf32>
    %c15_i32_19 = arith.constant 15 : i32
    %75 = tpu.dynamic_rotate %64 by %c15_i32_19 dim 1 : vector<8x512xf32>, i32 -> vector<8x512xf32>
    %cst_20 = arith.constant 0.000000e+00 : f32
    %76 = vector.shape_cast %14 : vector<1x512xi1> to vector<1x512xi1>
    %77 = vector.broadcast %76 : vector<1x512xi1> to vector<8x512xi1>
    %78 = vector.broadcast %cst_20 : f32 to vector<8x512xf32>
    %79 = arith.select %77, %75, %78 : vector<8x512xi1>, vector<8x512xf32>
    %c1_i32_21 = arith.constant 1 : i32
    %80 = tpu.dynamic_rotate %64 by %c1_i32_21 dim 1 : vector<8x512xf32>, i32 -> vector<8x512xf32>
    %cst_22 = arith.constant 0.000000e+00 : f32
    %81 = vector.shape_cast %10 : vector<1x512xi1> to vector<1x512xi1>
    %82 = vector.broadcast %81 : vector<1x512xi1> to vector<8x512xi1>
    %83 = vector.broadcast %cst_22 : f32 to vector<8x512xf32>
    %84 = arith.select %82, %80, %83 : vector<8x512xi1>, vector<8x512xf32>
    %c511_i32_23 = arith.constant 511 : i32
    %85 = tpu.dynamic_rotate %64 by %c511_i32_23 dim 1 : vector<8x512xf32>, i32 -> vector<8x512xf32>
    %cst_24 = arith.constant 0.000000e+00 : f32
    %86 = vector.shape_cast %12 : vector<1x512xi1> to vector<1x512xi1>
    %87 = vector.broadcast %86 : vector<1x512xi1> to vector<8x512xi1>
    %88 = vector.broadcast %cst_24 : f32 to vector<8x512xf32>
    %89 = arith.select %87, %85, %88 : vector<8x512xi1>, vector<8x512xf32>
    %c497_i32_25 = arith.constant 497 : i32
    %90 = tpu.dynamic_rotate %64 by %c497_i32_25 dim 1 : vector<8x512xf32>, i32 -> vector<8x512xf32>
    %cst_26 = arith.constant 0.000000e+00 : f32
    %91 = vector.shape_cast %15 : vector<1x512xi1> to vector<1x512xi1>
    %92 = vector.broadcast %91 : vector<1x512xi1> to vector<8x512xi1>
    %93 = vector.broadcast %cst_26 : f32 to vector<8x512xf32>
    %94 = arith.select %92, %90, %93 : vector<8x512xi1>, vector<8x512xf32>
    %c496_i32_27 = arith.constant 496 : i32
    %95 = tpu.dynamic_rotate %64 by %c496_i32_27 dim 1 : vector<8x512xf32>, i32 -> vector<8x512xf32>
    %cst_28 = arith.constant 0.000000e+00 : f32
    %96 = vector.shape_cast %8 : vector<1x512xi1> to vector<1x512xi1>
    %97 = vector.broadcast %96 : vector<1x512xi1> to vector<8x512xi1>
    %98 = vector.broadcast %cst_28 : f32 to vector<8x512xf32>
    %99 = arith.select %97, %95, %98 : vector<8x512xi1>, vector<8x512xf32>
    %c495_i32_29 = arith.constant 495 : i32
    %100 = tpu.dynamic_rotate %64 by %c495_i32_29 dim 1 : vector<8x512xf32>, i32 -> vector<8x512xf32>
    %cst_30 = arith.constant 0.000000e+00 : f32
    %101 = vector.shape_cast %16 : vector<1x512xi1> to vector<1x512xi1>
    %102 = vector.broadcast %101 : vector<1x512xi1> to vector<8x512xi1>
    %103 = vector.broadcast %cst_30 : f32 to vector<8x512xf32>
    %104 = arith.select %102, %100, %103 : vector<8x512xi1>, vector<8x512xf32>
    %105 = tpu.concatenate %69, %74, %79, %84, %64, %89, %94, %99, %104 in 0 : vector<8x512xf32>, vector<8x512xf32>, vector<8x512xf32>, vector<8x512xf32>, vector<8x512xf32>, vector<8x512xf32>, vector<8x512xf32>, vector<8x512xf32>, vector<8x512xf32> -> vector<72x512xf32>
    %106 = arith.truncf %105 : vector<72x512xf32> to vector<72x512xbf16>
    %c0_31 = arith.constant 0 : index
    %c0_32 = arith.constant 0 : index
    %107 = vector.load %arg3[%c0_31, %c0_32] : memref<8x72xbf16, #tpu.memory_space<vmem>>, vector<8x72xbf16>
    %cst_33 = arith.constant dense<0.000000e+00> : vector<8x512xf32>
    %108 = tpu.matmul %107, %106, %cst_33 {dimension_numbers = #tpu.dot_dimension_numbers<[1], [0], [0], [1], [0, 0, 1, 1], [], []>} : vector<8x72xbf16>, vector<72x512xbf16>, vector<8x512xf32> -> vector<8x512xf32>
    %cst_34 = arith.constant 0.000000e+00 : f32
    %109 = vector.broadcast %cst_34 : f32 to vector<8x512xf32>
    %110 = arith.maximumf %108, %109 : vector<8x512xf32>
    %c0_35 = arith.constant 0 : index
    %c0_36 = arith.constant 0 : index
    %111 = vector.load %arg4[%c0_35, %c0_36] : memref<8x512xf32, #tpu.memory_space<vmem>>, vector<8x512xf32>
    tpu.vector_store %arg4[%c0_35, %c0_36], %110 {strides = array<i32>} : memref<8x512xf32, #tpu.memory_space<vmem>>, vector<8x512xf32>,
    return
  }
  func.func @transform_0(%arg0: i32) -> (i32, i32) {
    %c0_i32 = arith.constant 0 : i32
    %c0_i32_0 = arith.constant 0 : i32
    return %c0_i32, %arg0 : i32, i32
  }
  func.func @transform_1(%arg0: i32) -> (i32, i32) {
    %c0_i32 = arith.constant 0 : i32
    %c0_i32_0 = arith.constant 0 : i32
    %c0_i32_1 = arith.constant 0 : i32
    return %c0_i32, %c0_i32_0 : i32, i32
  }
  func.func @transform_2(%arg0: i32) -> (i32, i32) {
    %c0_i32 = arith.constant 0 : i32
    %c0_i32_0 = arith.constant 0 : i32
    %c0_i32_1 = arith.constant 0 : i32
    return %c0_i32, %c0_i32_0 : i32, i32
  }
  func.func @transform_3(%arg0: i32) -> (i32, i32) {
    %c0_i32 = arith.constant 0 : i32
    %c0_i32_0 = arith.constant 0 : i32
    return %c0_i32, %arg0 : i32, i32
  }
}

</mosaic_0001>

<llo_original>
// kernel: tpu_custom_call.1
$region0: #{tpu_custom_call.1}
  #allocation0 [shape = 'u32[]', space=smem, size = 0x4, offset = 0x4, fixed_abs, tag = 'smem constant byte address 0x4 - core index']
  #allocation1 [shape = 'u32[144,128]{1,0:T(1,128)}', space=vmem, size = 0x12000, scoped, tag = 'internal scratch']
  %s0 = inlined_call_operand.hbm [shape: bf16[8,512], index: 0, kind: input, shape index: {}]
  %s1 = inlined_call_operand.hbm [shape: bf16[8,72], index: 1, kind: input, shape index: {}]
  %s2 = inlined_call_operand.vmem [shape: bf16[8,72], index: 2, kind: input, shape index: {}]
  %s3 = inlined_call_operand.hbm [shape: f32[8,512], index: 3, kind: output, shape index: {}]
  %s4 = sld [smem:[#allocation0]]
  $region30: #{tpu_custom_call.1} parent=0
    _
  %s6 = ssub.s32 1, %s4
  %s7 = scalar_select 0, %s6, %s4
  $region1: #{tpu_custom_call.1} parent=0
    #allocation2 [shape = 'u8[8192]{0}', space=vmem, size = 0x2000, scoped, tag = 'input window, operand 0, single buffered']
    #allocation3 [shape = 's32[1]{0}', space=sflag, size = 0x4, scoped, tag = 'scoped memory for tpu_custom_call.1']
    #allocation4 [shape = 's32[1]{0}', space=sflag, size = 0x4, scoped, tag = 'scoped memory for tpu_custom_call.1']
    #allocation5 [shape = 'u8[2048]{0}', space=vmem, size = 0x800, scoped, tag = 'input window, operand 1, single buffered']
    #allocation6 [shape = 's32[1]{0}', space=sflag, size = 0x4, scoped, tag = 'scoped memory for tpu_custom_call.1']
    #allocation7 [shape = 'u8[16384]{0}', space=vmem, size = 0x4000, scoped, tag = 'output window, operand 0, single buffered']
    %8 = vsyncpa [#allocation3], 0
    %9 = vsyncpa [#allocation6], 0
    %10 = vsyncpa [#allocation4], 0
    // Predicated region
    $region2: #{tpu_custom_call.1} parent=1 // pred_check
      _
    $region3: #{tpu_custom_call.1} parent=1 // pred_check_branch
      %12 = sbr.rel (0) target = $region5
    $region4: #{tpu_custom_call.1} parent=1 // pred_region
      %s14 = ssub.s32 256, 256
      %15 = vsyncadd [#allocation3], %s14
      %s17 = sshll.u32 [#allocation2], 4
      %s18 = int_to_ptr.vmem [resolvable:$true] %s17
      %20 = dma.hbm_to_vmem [thread:$0]  %s0, 256, %s18, [#allocation3]
    $region5: #{tpu_custom_call.1} parent=1 // pred_fallthru
      _
    // Predicated region
    $region6: #{tpu_custom_call.1} parent=1 // pred_check
      _
    $region7: #{tpu_custom_call.1} parent=1 // pred_check_branch
      %22 = sbr.rel (0) target = $region9
    $region8: #{tpu_custom_call.1} parent=1 // pred_region
      %s24 = ssub.s32 64, 64
      %25 = vsyncadd [#allocation6], %s24
      %s27 = sshll.u32 [#allocation5], 4
      %s28 = int_to_ptr.vmem [resolvable:$true] %s27
      %30 = dma.hbm_to_vmem [thread:$0]  %s1, 64, %s28, [#allocation6]
    $region9: #{tpu_custom_call.1} parent=1 // pred_fallthru
      _
    // Predicated region
    $region10: #{tpu_custom_call.1} parent=1 // pred_check
      _
    $region11: #{tpu_custom_call.1} parent=1 // pred_check_branch
      %32 = sbr.rel (0) target = $region13
    $region12: #{tpu_custom_call.1} parent=1 // pred_region
      _
    $region13: #{tpu_custom_call.1} parent=1 // pred_fallthru
      _
    // Predicated region
    $region14: #{tpu_custom_call.1} parent=1 // pred_check
      _
    $region15: #{tpu_custom_call.1} parent=1 // pred_check_branch
      %34 = sbr.rel (0) target = $region17
    $region16: #{tpu_custom_call.1} parent=1 // pred_region
      %35 = dma.done [#allocation3], 256
    $region17: #{tpu_custom_call.1} parent=1 // pred_fallthru
      _
    // Predicated region
    $region18: #{tpu_custom_call.1} parent=1 // pred_check
      _
    $region19: #{tpu_custom_call.1} parent=1 // pred_check_branch
      %37 = sbr.rel (0) target = $region21
    $region20: #{tpu_custom_call.1} parent=1 // pred_region
      %38 = dma.done [#allocation6], 64
    $region21: #{tpu_custom_call.1} parent=1 // pred_fallthru
      _
    %v40 = vlaneseq
    %v41 = vand.u32 %v40, 127
    %v42 = vadd.s32 %v41, 128
    %v43 = vadd.s32 %v41, 256
    %v44 = vadd.s32 %v41, 384
    %v45 = vand.u32 %v41, 255
    %v46 = vand.u32 %v42, 255
    %v47 = vand.u32 %v43, 255
    %v48 = vand.u32 %v44, 255
    %v49 = vand.u32 %v41, 15
    %v50 = vand.u32 %v42, 15
    %v51 = vand.u32 %v43, 15
    %v52 = vand.u32 %v44, 15
    %vm53 = vcmp.ge.s32.totalorder %v45, 16
    %vm54 = vcmp.ge.s32.totalorder %v46, 16
    %vm55 = vcmp.ge.s32.totalorder %v47, 16
    %vm56 = vcmp.ge.s32.totalorder %v48, 16
    %vm57 = vcmp.lt.s32.totalorder %v45, 240
    %vm58 = vcmp.lt.s32.totalorder %v46, 240
    %vm59 = vcmp.lt.s32.totalorder %v47, 240
    %vm60 = vcmp.lt.s32.totalorder %v48, 240
    %vm61 = vcmp.ge.s32.totalorder %v49, 1
    %vm62 = vcmp.ge.s32.totalorder %v50, 1
    %vm63 = vcmp.ge.s32.totalorder %v51, 1
    %vm64 = vcmp.ge.s32.totalorder %v52, 1
    %vm65 = vcmp.le.s32.totalorder %v49, 14
    %vm66 = vcmp.le.s32.totalorder %v50, 14
    %vm67 = vcmp.le.s32.totalorder %v51, 14
    %vm68 = vcmp.le.s32.totalorder %v52, 14
    %vm69 = vmand %vm53, %vm61
    %vm70 = vmand %vm54, %vm62
    %vm71 = vmand %vm55, %vm63
    %vm72 = vmand %vm56, %vm64
    %vm73 = vmand %vm53, %vm65
    %vm74 = vmand %vm54, %vm66
    %vm75 = vmand %vm55, %vm67
    %vm76 = vmand %vm56, %vm68
    %vm77 = vmand %vm57, %vm61
    %vm78 = vmand %vm58, %vm62
    %vm79 = vmand %vm59, %vm63
    %vm80 = vmand %vm60, %vm64
    %vm81 = vmand %vm57, %vm65
    %vm82 = vmand %vm58, %vm66
    %vm83 = vmand %vm59, %vm67
    %vm84 = vmand %vm60, %vm68
    %v85 = vld [vmem:[#allocation2] sm:$0xff]
    %v86 = vld [vmem:[#allocation2 + $0x8] sm:$0xff]
    %v87 = vunpack.c.l.bf16 %v85
    %v88 = vunpack.c.h.bf16 %v85
    %v89 = vunpack.c.l.bf16 %v86
    %v90 = vunpack.c.h.bf16 %v86
    %91 = vrot.lane.b32.xlu0 %v87, 17
    %v92 = vpop.permute.xlu0 %91
    %93 = vrot.lane.b32.xlu0 %v88, 17
    %v94 = vpop.permute.xlu0 %93
    %95 = vrot.lane.b32.xlu0 %v89, 17
    %v96 = vpop.permute.xlu0 %95
    %97 = vrot.lane.b32.xlu0 %v90, 17
    %v98 = vpop.permute.xlu0 %97
    %vm99 = vcmp.lt.s32.totalorder %v41, 17
    %v100 = vsel %vm99, %v96, %v98
    %v101 = vsel %vm99, %v94, %v96
    %v102 = vsel %vm99, %v92, %v94
    %v103 = vsel %vm99, %v98, %v92
    %v104 = vsel %vm69, 1, 0
    %v105 = vsel %vm70, 1, 0
    %v106 = vsel %vm71, 1, 0
    %v107 = vsel %vm72, 1, 0
    %vm108 = vcmp.eq.s32.totalorder %v104, 1
    %vm109 = vcmp.eq.s32.totalorder %v105, 1
    %vm110 = vcmp.eq.s32.totalorder %v106, 1
    %vm111 = vcmp.eq.s32.totalorder %v107, 1
    %v112 = vsel %vm108, %v103, 0.0
    %v113 = vsel %vm109, %v102, 0.0
    %v114 = vsel %vm110, %v101, 0.0
    %v115 = vsel %vm111, %v100, 0.0
    %116 = vrot.lane.b32.xlu0 %v87, 16
    %v117 = vpop.permute.xlu0 %116
    %118 = vrot.lane.b32.xlu0 %v88, 16
    %v119 = vpop.permute.xlu0 %118
    %120 = vrot.lane.b32.xlu0 %v89, 16
    %v121 = vpop.permute.xlu0 %120
    %122 = vrot.lane.b32.xlu0 %v90, 16
    %v123 = vpop.permute.xlu0 %122
    %vm124 = vcmp.lt.s32.totalorder %v41, 16
    %v125 = vsel %vm124, %v121, %v123
    %v126 = vsel %vm124, %v119, %v121
    %v127 = vsel %vm124, %v117, %v119
    %v128 = vsel %vm124, %v123, %v117
    %v129 = vsel %vm53, 1, 0
    %v130 = vsel %vm54, 1, 0
    %v131 = vsel %vm55, 1, 0
    %v132 = vsel %vm56, 1, 0
    %vm133 = vcmp.eq.s32.totalorder %v129, 1
    %vm134 = vcmp.eq.s32.totalorder %v130, 1
    %vm135 = vcmp.eq.s32.totalorder %v131, 1
    %vm136 = vcmp.eq.s32.totalorder %v132, 1
    %v137 = vsel %vm133, %v128, 0.0
    %v138 = vsel %vm134, %v127, 0.0
    %v139 = vsel %vm135, %v126, 0.0
    %v140 = vsel %vm136, %v125, 0.0
    %141 = vrot.lane.b32.xlu0 %v87, 15
    %v142 = vpop.permute.xlu0 %141
    %143 = vrot.lane.b32.xlu0 %v88, 15
    %v144 = vpop.permute.xlu0 %143
    %145 = vrot.lane.b32.xlu0 %v89, 15
    %v146 = vpop.permute.xlu0 %145
    %147 = vrot.lane.b32.xlu0 %v90, 15
    %v148 = vpop.permute.xlu0 %147
    %vm149 = vcmp.lt.s32.totalorder %v41, 15
    %v150 = vsel %vm149, %v146, %v148
    %v151 = vsel %vm149, %v144, %v146
    %v152 = vsel %vm149, %v142, %v144
    %v153 = vsel %vm149, %v148, %v142
    %v154 = vsel %vm73, 1, 0
    %v155 = vsel %vm74, 1, 0
    %v156 = vsel %vm75, 1, 0
    %v157 = vsel %vm76, 1, 0
    %vm158 = vcmp.eq.s32.totalorder %v154, 1
    %vm159 = vcmp.eq.s32.totalorder %v155, 1
    %vm160 = vcmp.eq.s32.totalorder %v156, 1
    %vm161 = vcmp.eq.s32.totalorder %v157, 1
    %v162 = vsel %vm158, %v153, 0.0
    %v163 = vsel %vm159, %v152, 0.0
    %v164 = vsel %vm160, %v151, 0.0
    %v165 = vsel %vm161, %v150, 0.0
    %166 = vrot.lane.b32.xlu0 %v87, 1
    %v167 = vpop.permute.xlu0 %166
    %168 = vrot.lane.b32.xlu0 %v88, 1
    %v169 = vpop.permute.xlu0 %168
    %170 = vrot.lane.b32.xlu0 %v89, 1
    %v171 = vpop.permute.xlu0 %170
    %172 = vrot.lane.b32.xlu0 %v90, 1
    %v173 = vpop.permute.xlu0 %172
    %vm174 = vcmp.lt.s32.totalorder %v41, 1
    %v175 = vsel %vm174, %v171, %v173
    %v176 = vsel %vm174, %v169, %v171
    %v177 = vsel %vm174, %v167, %v169
    %v178 = vsel %vm174, %v173, %v167
    %v179 = vsel %vm61, 1, 0
    %v180 = vsel %vm62, 1, 0
    %v181 = vsel %vm63, 1, 0
    %v182 = vsel %vm64, 1, 0
    %vm183 = vcmp.eq.s32.totalorder %v179, 1
    %vm184 = vcmp.eq.s32.totalorder %v180, 1
    %vm185 = vcmp.eq.s32.totalorder %v181, 1
    %vm186 = vcmp.eq.s32.totalorder %v182, 1
    %v187 = vsel %vm183, %v178, 0.0
    %v188 = vsel %vm184, %v177, 0.0
    %v189 = vsel %vm185, %v176, 0.0
    %v190 = vsel %vm186, %v175, 0.0
    %191 = vrot.lane.b32.xlu0 %v87, 127
    %v192 = vpop.permute.xlu0 %191
    %193 = vrot.lane.b32.xlu0 %v88, 127
    %v194 = vpop.permute.xlu0 %193
    %195 = vrot.lane.b32.xlu0 %v89, 127
    %v196 = vpop.permute.xlu0 %195
    %197 = vrot.lane.b32.xlu0 %v90, 127
    %v198 = vpop.permute.xlu0 %197
    %vm199 = vcmp.lt.s32.totalorder %v41, 127
    %v200 = vsel %vm199, %v196, %v198
    %v201 = vsel %vm199, %v194, %v196
    %v202 = vsel %vm199, %v192, %v194
    %v203 = vsel %vm199, %v198, %v192
    %v204 = vsel %vm65, 1, 0
    %v205 = vsel %vm66, 1, 0
    %v206 = vsel %vm67, 1, 0
    %v207 = vsel %vm68, 1, 0
    %vm208 = vcmp.eq.s32.totalorder %v204, 1
    %vm209 = vcmp.eq.s32.totalorder %v205, 1
    %vm210 = vcmp.eq.s32.totalorder %v206, 1
    %vm211 = vcmp.eq.s32.totalorder %v207, 1
    %v212 = vsel %vm208, %v202, 0.0
    %v213 = vsel %vm209, %v201, 0.0
    %v214 = vsel %vm210, %v200, 0.0
    %v215 = vsel %vm211, %v203, 0.0
    %216 = vrot.lane.b32.xlu0 %v87, 113
    %v217 = vpop.permute.xlu0 %216
    %218 = vrot.lane.b32.xlu0 %v88, 113
    %v219 = vpop.permute.xlu0 %218
    %220 = vrot.lane.b32.xlu0 %v89, 113
    %v221 = vpop.permute.xlu0 %220
    %222 = vrot.lane.b32.xlu0 %v90, 113
    %v223 = vpop.permute.xlu0 %222
    %vm224 = vcmp.lt.s32.totalorder %v41, 113
    %v225 = vsel %vm224, %v221, %v223
    %v226 = vsel %vm224, %v219, %v221
    %v227 = vsel %vm224, %v217, %v219
    %v228 = vsel %vm224, %v223, %v217
    %v229 = vsel %vm77, 1, 0
    %v230 = vsel %vm78, 1, 0
    %v231 = vsel %vm79, 1, 0
    %v232 = vsel %vm80, 1, 0
    %vm233 = vcmp.eq.s32.totalorder %v229, 1
    %vm234 = vcmp.eq.s32.totalorder %v230, 1
    %vm235 = vcmp.eq.s32.totalorder %v231, 1
    %vm236 = vcmp.eq.s32.totalorder %v232, 1
    %v237 = vsel %vm233, %v227, 0.0
    %v238 = vsel %vm234, %v226, 0.0
    %v239 = vsel %vm235, %v225, 0.0
    %v240 = vsel %vm236, %v228, 0.0
    %241 = vrot.lane.b32.xlu0 %v87, 112
    %v242 = vpop.permute.xlu0 %241
    %243 = vrot.lane.b32.xlu0 %v88, 112
    %v244 = vpop.permute.xlu0 %243
    %245 = vrot.lane.b32.xlu0 %v89, 112
    %v246 = vpop.permute.xlu0 %245
    %247 = vrot.lane.b32.xlu0 %v90, 112
    %v248 = vpop.permute.xlu0 %247
    %vm249 = vcmp.lt.s32.totalorder %v41, 112
    %v250 = vsel %vm249, %v246, %v248
    %v251 = vsel %vm249, %v244, %v246
    %v252 = vsel %vm249, %v242, %v244
    %v253 = vsel %vm249, %v248, %v242
    %v254 = vsel %vm57, 1, 0
    %v255 = vsel %vm58, 1, 0
    %v256 = vsel %vm59, 1, 0
    %v257 = vsel %vm60, 1, 0
    %vm258 = vcmp.eq.s32.totalorder %v254, 1
    %vm259 = vcmp.eq.s32.totalorder %v255, 1
    %vm260 = vcmp.eq.s32.totalorder %v256, 1
    %vm261 = vcmp.eq.s32.totalorder %v257, 1
    %v262 = vsel %vm258, %v252, 0.0
    %v263 = vsel %vm259, %v251, 0.0
    %v264 = vsel %vm260, %v250, 0.0
    %v265 = vsel %vm261, %v253, 0.0
    %266 = vrot.lane.b32.xlu0 %v87, 111
    %v267 = vpop.permute.xlu0 %266
    %268 = vrot.lane.b32.xlu0 %v88, 111
    %v269 = vpop.permute.xlu0 %268
    %270 = vrot.lane.b32.xlu0 %v89, 111
    %v271 = vpop.permute.xlu0 %270
    %272 = vrot.lane.b32.xlu0 %v90, 111
    %v273 = vpop.permute.xlu0 %272
    %vm274 = vcmp.lt.s32.totalorder %v41, 111
    %v275 = vsel %vm274, %v271, %v273
    %v276 = vsel %vm274, %v269, %v271
    %v277 = vsel %vm274, %v267, %v269
    %v278 = vsel %vm274, %v273, %v267
    %v279 = vsel %vm81, 1, 0
    %v280 = vsel %vm82, 1, 0
    %v281 = vsel %vm83, 1, 0
    %v282 = vsel %vm84, 1, 0
    %vm283 = vcmp.eq.s32.totalorder %v279, 1
    %vm284 = vcmp.eq.s32.totalorder %v280, 1
    %vm285 = vcmp.eq.s32.totalorder %v281, 1
    %vm286 = vcmp.eq.s32.totalorder %v282, 1
    %v287 = vsel %vm283, %v277, 0.0
    %v288 = vsel %vm284, %v276, 0.0
    %v289 = vsel %vm285, %v275, 0.0
    %v290 = vsel %vm286, %v278, 0.0
    %v291 = vpack.c.bf16 %v137, %v112
    %v292 = vpack.c.bf16 %v138, %v113
    %v293 = vpack.c.bf16 %v139, %v114
    %v294 = vpack.c.bf16 %v140, %v115
    %v295 = vpack.c.bf16 %v187, %v162
    %v296 = vpack.c.bf16 %v188, %v163
    %v297 = vpack.c.bf16 %v189, %v164
    %v298 = vpack.c.bf16 %v190, %v165
    %v299 = vpack.c.bf16 %v212, %v87
    %v300 = vpack.c.bf16 %v213, %v88
    %v301 = vpack.c.bf16 %v214, %v89
    %v302 = vpack.c.bf16 %v215, %v90
    %v303 = vpack.c.bf16 %v262, %v237
    %v304 = vpack.c.bf16 %v263, %v238
    %v305 = vpack.c.bf16 %v264, %v239
    %v306 = vpack.c.bf16 %v265, %v240
    %v307 = vpack.c.bf16 %v287, %v287
    %v308 = vpack.c.bf16 %v288, %v288
    %v309 = vpack.c.bf16 %v289, %v289
    %v310 = vpack.c.bf16 %v290, %v290
    %v311 = vld [vmem:[#allocation5] sm:$0xf]
    %vm312 = vcmask 588800
    %v314 = vsel %vm312, %v311, 0
    %vm316 = vcmask 1043456
    %v318 = vsel %vm316, %v307, 0
    %v321 = vsel %vm316, %v308, 0
    %v324 = vsel %vm316, %v309, 0
    %v327 = vsel %vm316, %v310, 0
    %329 = vmatprep.subr.bf16.mxu0 %v292
    %330 = vmatpush1.bf16.msra.mxu0 %v291
    %331 = vmatprep.subr.bf16.mxu0 %v296
    %332 = vmatpush1.bf16.msra.mxu0 %v295
    %333 = vmatprep.subr.bf16.mxu0 %v300
    %334 = vmatpush1.bf16.msra.mxu0 %v299
    %335 = vmatprep.subr.bf16.mxu0 %v304
    %336 = vmatpush1.bf16.msra.mxu0 %v303
    %337 = vmatprep.subr.bf16.mxu0 %v321
    %338 = vmatpush1.bf16.msra.mxu0 %v318
    %339 = vmatprep.subr.bf16.mxu0 0
    %340 = vmatpush1.bf16.msra.mxu0 0
    %341 = vmatprep.subr.bf16.mxu0 0
    %342 = vmatpush1.bf16.msra.mxu0 0
    %343 = vmatprep.subr.bf16.mxu0 0
    %344 = vmatpush1.bf16.msra.mxu0 0
    %345 = vmatprep.subr.bf16.mxu0 0
    %346 = vmatpush1.bf16.msra.mxu0 0
    %347 = vmatprep.subr.bf16.mxu0 0
    %348 = vmatpush1.bf16.msra.mxu0 0
    %349 = vmatprep.subr.bf16.mxu0 0
    %350 = vmatpush1.bf16.msra.mxu0 0
    %351 = vmatprep.subr.bf16.mxu0 0
    %352 = vmatpush1.bf16.msra.mxu0 0
    %353 = vmatprep.subr.bf16.mxu0 0
    %354 = vmatpush1.bf16.msra.mxu0 0
    %355 = vmatprep.subr.bf16.mxu0 0
    %356 = vmatpush1.bf16.msra.mxu0 0
    %357 = vmatprep.subr.bf16.mxu0 0
    %358 = vmatpush1.bf16.msra.mxu0 0
    %359 = vmatprep.subr.bf16.mxu0 0
    %360 = vmatpush1.bf16.msra.mxu0 0
    %361 = vmatprep.mubr.bf16.mxu0 0
    %362 = vmatmul.mubr.bf16.gmra.mrb[0].mxu0 %v314
    %v363 = vpop.f32.mrb[0].mxu0
    %v364 = vadd.f32 0.0, %v363
    %v365 = vpop.f32.mrb[0].mxu0
    %v366 = vadd.f32 0.0, %v365
    %v367 = vpop.f32.mrb[0].mxu0
    %v368 = vpop.f32.mrb[0].mxu0
    %369 = vdwg.mxu0
    %370 = vmatprep.subr.bf16.mxu0 %v294
    %371 = vmatpush1.bf16.msra.mxu0 %v293
    %372 = vmatprep.subr.bf16.mxu0 %v298
    %373 = vmatpush1.bf16.msra.mxu0 %v297
    %374 = vmatprep.subr.bf16.mxu0 %v302
    %375 = vmatpush1.bf16.msra.mxu0 %v301
    %376 = vmatprep.subr.bf16.mxu0 %v306
    %377 = vmatpush1.bf16.msra.mxu0 %v305
    %378 = vmatprep.subr.bf16.mxu0 %v327
    %379 = vmatpush1.bf16.msra.mxu0 %v324
    %380 = vmatprep.subr.bf16.mxu0 0
    %381 = vmatpush1.bf16.msra.mxu0 0
    %382 = vmatprep.subr.bf16.mxu0 0
    %383 = vmatpush1.bf16.msra.mxu0 0
    %384 = vmatprep.subr.bf16.mxu0 0
    %385 = vmatpush1.bf16.msra.mxu0 0
    %386 = vmatprep.subr.bf16.mxu0 0
    %387 = vmatpush1.bf16.msra.mxu0 0
    %388 = vmatprep.subr.bf16.mxu0 0
    %389 = vmatpush1.bf16.msra.mxu0 0
    %390 = vmatprep.subr.bf16.mxu0 0
    %391 = vmatpush1.bf16.msra.mxu0 0
    %392 = vmatprep.subr.bf16.mxu0 0
    %393 = vmatpush1.bf16.msra.mxu0 0
    %394 = vmatprep.subr.bf16.mxu0 0
    %395 = vmatpush1.bf16.msra.mxu0 0
    %396 = vmatprep.subr.bf16.mxu0 0
    %397 = vmatpush1.bf16.msra.mxu0 0
    %398 = vmatprep.subr.bf16.mxu0 0
    %399 = vmatpush1.bf16.msra.mxu0 0
    %400 = vmatprep.subr.bf16.mxu0 0
    %401 = vmatpush1.bf16.msra.mxu0 0
    %402 = vmatprep.mubr.bf16.mxu0 0
    %403 = vmatmul.mubr.bf16.gmra.mrb[0].mxu0 %v314
    %v404 = vpop.f32.mrb[0].mxu0
    %v405 = vadd.f32 0.0, %v404
    %v406 = vpop.f32.mrb[0].mxu0
    %v407 = vadd.f32 0.0, %v406
    %v408 = vpop.f32.mrb[0].mxu0
    %v409 = vpop.f32.mrb[0].mxu0
    %410 = vdwg.mxu0
    %v411 = vmax.f32 %v364, 0.0
    %v412 = vmax.f32 %v366, 0.0
    %v413 = vmax.f32 %v405, 0.0
    %v414 = vmax.f32 %v407, 0.0
    %415 = vrot.lane.b32.xlu0 %v411, 17
    %v416 = vpop.permute.xlu0 %415
    %417 = vrot.lane.b32.xlu0 %v412, 17
    %v418 = vpop.permute.xlu0 %417
    %419 = vrot.lane.b32.xlu0 %v413, 17
    %v420 = vpop.permute.xlu0 %419
    %421 = vrot.lane.b32.xlu0 %v414, 17
    %v422 = vpop.permute.xlu0 %421
    %v423 = vsel %vm99, %v420, %v422
    %v424 = vsel %vm99, %v418, %v420
    %v425 = vsel %vm99, %v416, %v418
    %v426 = vsel %vm99, %v422, %v416
    %v427 = vsel %vm108, %v426, 0.0
    %v428 = vsel %vm109, %v425, 0.0
    %v429 = vsel %vm110, %v424, 0.0
    %v430 = vsel %vm111, %v423, 0.0
    %431 = vrot.lane.b32.xlu0 %v411, 16
    %v432 = vpop.permute.xlu0 %431
    %433 = vrot.lane.b32.xlu0 %v412, 16
    %v434 = vpop.permute.xlu0 %433
    %435 = vrot.lane.b32.xlu0 %v413, 16
    %v436 = vpop.permute.xlu0 %435
    %437 = vrot.lane.b32.xlu0 %v414, 16
    %v438 = vpop.permute.xlu0 %437
    %v439 = vsel %vm124, %v436, %v438
    %v440 = vsel %vm124, %v434, %v436
    %v441 = vsel %vm124, %v432, %v434
    %v442 = vsel %vm124, %v438, %v432
    %v443 = vsel %vm133, %v442, 0.0
    %v444 = vsel %vm134, %v441, 0.0
    %v445 = vsel %vm135, %v440, 0.0
    %v446 = vsel %vm136, %v439, 0.0
    %447 = vrot.lane.b32.xlu0 %v411, 15
    %v448 = vpop.permute.xlu0 %447
    %449 = vrot.lane.b32.xlu0 %v412, 15
    %v450 = vpop.permute.xlu0 %449
    %451 = vrot.lane.b32.xlu0 %v413, 15
    %v452 = vpop.permute.xlu0 %451
    %453 = vrot.lane.b32.xlu0 %v414, 15
    %v454 = vpop.permute.xlu0 %453
    %v455 = vsel %vm149, %v452, %v454
    %v456 = vsel %vm149, %v450, %v452
    %v457 = vsel %vm149, %v448, %v450
    %v458 = vsel %vm149, %v454, %v448
    %v459 = vsel %vm158, %v458, 0.0
    %v460 = vsel %vm159, %v457, 0.0
    %v461 = vsel %vm160, %v456, 0.0
    %v462 = vsel %vm161, %v455, 0.0
    %463 = vrot.lane.b32.xlu0 %v411, 1
    %v464 = vpop.permute.xlu0 %463
    %465 = vrot.lane.b32.xlu0 %v412, 1
    %v466 = vpop.permute.xlu0 %465
    %467 = vrot.lane.b32.xlu0 %v413, 1
    %v468 = vpop.permute.xlu0 %467
    %469 = vrot.lane.b32.xlu0 %v414, 1
    %v470 = vpop.permute.xlu0 %469
    %v471 = vsel %vm174, %v468, %v470
    %v472 = vsel %vm174, %v466, %v468
    %v473 = vsel %vm174, %v464, %v466
    %v474 = vsel %vm174, %v470, %v464
    %v475 = vsel %vm183, %v474, 0.0
    %v476 = vsel %vm184, %v473, 0.0
    %v477 = vsel %vm185, %v472, 0.0
    %v478 = vsel %vm186, %v471, 0.0
    %479 = vrot.lane.b32.xlu0 %v411, 127
    %v480 = vpop.permute.xlu0 %479
    %481 = vrot.lane.b32.xlu0 %v412, 127
    %v482 = vpop.permute.xlu0 %481
    %483 = vrot.lane.b32.xlu0 %v413, 127
    %v484 = vpop.permute.xlu0 %483
    %485 = vrot.lane.b32.xlu0 %v414, 127
    %v486 = vpop.permute.xlu0 %485
    %v487 = vsel %vm199, %v484, %v486
    %v488 = vsel %vm199, %v482, %v484
    %v489 = vsel %vm199, %v480, %v482
    %v490 = vsel %vm199, %v486, %v480
    %v491 = vsel %vm208, %v489, 0.0
    %v492 = vsel %vm209, %v488, 0.0
    %v493 = vsel %vm210, %v487, 0.0
    %v494 = vsel %vm211, %v490, 0.0
    %495 = vrot.lane.b32.xlu0 %v411, 113
    %v496 = vpop.permute.xlu0 %495
    %497 = vrot.lane.b32.xlu0 %v412, 113
    %v498 = vpop.permute.xlu0 %497
    %499 = vrot.lane.b32.xlu0 %v413, 113
    %v500 = vpop.permute.xlu0 %499
    %501 = vrot.lane.b32.xlu0 %v414, 113
    %v502 = vpop.permute.xlu0 %501
    %v503 = vsel %vm224, %v500, %v502
    %v504 = vsel %vm224, %v498, %v500
    %v505 = vsel %vm224, %v496, %v498
    %v506 = vsel %vm224, %v502, %v496
    %v507 = vsel %vm233, %v505, 0.0
    %v508 = vsel %vm234, %v504, 0.0
    %v509 = vsel %vm235, %v503, 0.0
    %v510 = vsel %vm236, %v506, 0.0
    %511 = vrot.lane.b32.xlu0 %v411, 112
    %v512 = vpop.permute.xlu0 %511
    %513 = vrot.lane.b32.xlu0 %v412, 112
    %v514 = vpop.permute.xlu0 %513
    %515 = vrot.lane.b32.xlu0 %v413, 112
    %v516 = vpop.permute.xlu0 %515
    %517 = vrot.lane.b32.xlu0 %v414, 112
    %v518 = vpop.permute.xlu0 %517
    %v519 = vsel %vm249, %v516, %v518
    %v520 = vsel %vm249, %v514, %v516
    %v521 = vsel %vm249, %v512, %v514
    %v522 = vsel %vm249, %v518, %v512
    %v523 = vsel %vm258, %v521, 0.0
    %v524 = vsel %vm259, %v520, 0.0
    %v525 = vsel %vm260, %v519, 0.0
    %v526 = vsel %vm261, %v522, 0.0
    %527 = vrot.lane.b32.xlu0 %v411, 111
    %v528 = vpop.permute.xlu0 %527
    %529 = vrot.lane.b32.xlu0 %v412, 111
    %v530 = vpop.permute.xlu0 %529
    %531 = vrot.lane.b32.xlu0 %v413, 111
    %v532 = vpop.permute.xlu0 %531
    %533 = vrot.lane.b32.xlu0 %v414, 111
    %v534 = vpop.permute.xlu0 %533
    %v535 = vsel %vm274, %v532, %v534
    %v536 = vsel %vm274, %v530, %v532
    %v537 = vsel %vm274, %v528, %v530
    %v538 = vsel %vm274, %v534, %v528
    %v539 = vsel %vm283, %v537, 0.0
    %v540 = vsel %vm284, %v536, 0.0
    %v541 = vsel %vm285, %v535, 0.0
    %v542 = vsel %vm286, %v538, 0.0
    %v543 = vpack.c.bf16 %v443, %v427
    %v544 = vpack.c.bf16 %v444, %v428
    %v545 = vpack.c.bf16 %v445, %v429
    %v546 = vpack.c.bf16 %v446, %v430
    %v547 = vpack.c.bf16 %v475, %v459
    %v548 = vpack.c.bf16 %v476, %v460
    %v549 = vpack.c.bf16 %v477, %v461
    %v550 = vpack.c.bf16 %v478, %v462
    %v551 = vpack.c.bf16 %v491, %v411
    %v552 = vpack.c.bf16 %v492, %v412
    %v553 = vpack.c.bf16 %v493, %v413
    %v554 = vpack.c.bf16 %v494, %v414
    %v555 = vpack.c.bf16 %v523, %v507
    %v556 = vpack.c.bf16 %v524, %v508
    %v557 = vpack.c.bf16 %v525, %v509
    %v558 = vpack.c.bf16 %v526, %v510
    %v559 = vpack.c.bf16 %v539, %v539
    %v560 = vpack.c.bf16 %v540, %v540
    %v561 = vpack.c.bf16 %v541, %v541
    %v562 = vpack.c.bf16 %v542, %v542
    %v563 = vld [vmem:[%s2] sm:$0xf]
    %v565 = vsel %vm312, %v563, 0
    %v568 = vsel %vm316, %v559, 0
    %v571 = vsel %vm316, %v560, 0
    %v574 = vsel %vm316, %v561, 0
    %v577 = vsel %vm316, %v562, 0
    %579 = vmatprep.subr.bf16.mxu0 %v544
    %580 = vmatpush1.bf16.msra.mxu0 %v543
    %581 = vmatprep.subr.bf16.mxu0 %v548
    %582 = vmatpush1.bf16.msra.mxu0 %v547
    %583 = vmatprep.subr.bf16.mxu0 %v552
    %584 = vmatpush1.bf16.msra.mxu0 %v551
    %585 = vmatprep.subr.bf16.mxu0 %v556
    %586 = vmatpush1.bf16.msra.mxu0 %v555
    %587 = vmatprep.subr.bf16.mxu0 %v571
    %588 = vmatpush1.bf16.msra.mxu0 %v568
    %589 = vmatprep.subr.bf16.mxu0 0
    %590 = vmatpush1.bf16.msra.mxu0 0
    %591 = vmatprep.subr.bf16.mxu0 0
    %592 = vmatpush1.bf16.msra.mxu0 0
    %593 = vmatprep.subr.bf16.mxu0 0
    %594 = vmatpush1.bf16.msra.mxu0 0
    %595 = vmatprep.subr.bf16.mxu0 0
    %596 = vmatpush1.bf16.msra.mxu0 0
    %597 = vmatprep.subr.bf16.mxu0 0
    %598 = vmatpush1.bf16.msra.mxu0 0
    %599 = vmatprep.subr.bf16.mxu0 0
    %600 = vmatpush1.bf16.msra.mxu0 0
    %601 = vmatprep.subr.bf16.mxu0 0
    %602 = vmatpush1.bf16.msra.mxu0 0
    %603 = vmatprep.subr.bf16.mxu0 0
    %604 = vmatpush1.bf16.msra.mxu0 0
    %605 = vmatprep.subr.bf16.mxu0 0
    %606 = vmatpush1.bf16.msra.mxu0 0
    %607 = vmatprep.subr.bf16.mxu0 0
    %608 = vmatpush1.bf16.msra.mxu0 0
    %609 = vmatprep.subr.bf16.mxu0 0
    %610 = vmatpush1.bf16.msra.mxu0 0
    %611 = vmatprep.mubr.bf16.mxu0 0
    %612 = vmatmul.mubr.bf16.gmra.mrb[0].mxu0 %v565
    %v613 = vpop.f32.mrb[0].mxu0
    %v614 = vadd.f32 0.0, %v613
    %v615 = vpop.f32.mrb[0].mxu0
    %v616 = vadd.f32 0.0, %v615
    %v617 = vpop.f32.mrb[0].mxu0
    %v618 = vpop.f32.mrb[0].mxu0
    %619 = vdwg.mxu0
    %620 = vmatprep.subr.bf16.mxu0 %v546
    %621 = vmatpush1.bf16.msra.mxu0 %v545
    %622 = vmatprep.subr.bf16.mxu0 %v550
    %623 = vmatpush1.bf16.msra.mxu0 %v549
    %624 = vmatprep.subr.bf16.mxu0 %v554
    %625 = vmatpush1.bf16.msra.mxu0 %v553
    %626 = vmatprep.subr.bf16.mxu0 %v558
    %627 = vmatpush1.bf16.msra.mxu0 %v557
    %628 = vmatprep.subr.bf16.mxu0 %v577
    %629 = vmatpush1.bf16.msra.mxu0 %v574
    %630 = vmatprep.subr.bf16.mxu0 0
    %631 = vmatpush1.bf16.msra.mxu0 0
    %632 = vmatprep.subr.bf16.mxu0 0
    %633 = vmatpush1.bf16.msra.mxu0 0
    %634 = vmatprep.subr.bf16.mxu0 0
    %635 = vmatpush1.bf16.msra.mxu0 0
    %636 = vmatprep.subr.bf16.mxu0 0
    %637 = vmatpush1.bf16.msra.mxu0 0
    %638 = vmatprep.subr.bf16.mxu0 0
    %639 = vmatpush1.bf16.msra.mxu0 0
    %640 = vmatprep.subr.bf16.mxu0 0
    %641 = vmatpush1.bf16.msra.mxu0 0
    %642 = vmatprep.subr.bf16.mxu0 0
    %643 = vmatpush1.bf16.msra.mxu0 0
    %644 = vmatprep.subr.bf16.mxu0 0
    %645 = vmatpush1.bf16.msra.mxu0 0
    %646 = vmatprep.subr.bf16.mxu0 0
    %647 = vmatpush1.bf16.msra.mxu0 0
    %648 = vmatprep.subr.bf16.mxu0 0
    %649 = vmatpush1.bf16.msra.mxu0 0
    %650 = vmatprep.subr.bf16.mxu0 0
    %651 = vmatpush1.bf16.msra.mxu0 0
    %652 = vmatprep.mubr.bf16.mxu0 0
    %653 = vmatmul.mubr.bf16.gmra.mrb[0].mxu0 %v565
    %v654 = vpop.f32.mrb[0].mxu0
    %v655 = vadd.f32 0.0, %v654
    %v656 = vpop.f32.mrb[0].mxu0
    %v657 = vadd.f32 0.0, %v656
    %v658 = vpop.f32.mrb[0].mxu0
    %v659 = vpop.f32.mrb[0].mxu0
    %660 = vdwg.mxu0
    %v661 = vmax.f32 %v614, 0.0
    %v662 = vmax.f32 %v616, 0.0
    %v663 = vmax.f32 %v655, 0.0
    %v664 = vmax.f32 %v657, 0.0
    %665 = vst [vmem:[#allocation7] sm:$0xff] %v661
    %666 = vst [vmem:[#allocation7 + $0x8] sm:$0xff] %v662
    %667 = vst [vmem:[#allocation7 + $0x10] sm:$0xff] %v663
    %668 = vst [vmem:[#allocation7 + $0x18] sm:$0xff] %v664
    // Predicated region
    $region22: #{tpu_custom_call.1} parent=1 // pred_check
      _
    $region23: #{tpu_custom_call.1} parent=1 // pred_check_branch
      %670 = sbr.rel (0) target = $region25
    $region24: #{tpu_custom_call.1} parent=1 // pred_region
      %s672 = ssub.s32 512, 512
      %673 = vsyncadd [#allocation4], %s672
      %s675 = sshll.u32 [#allocation7], 4
      %s676 = int_to_ptr.vmem [resolvable:$true] %s675
      %678 = dma.vmem_to_hbm [thread:$0]  %s676, 512, %s3, [#allocation4]
    $region25: #{tpu_custom_call.1} parent=1 // pred_fallthru
      _
    // Predicated region
    $region26: #{tpu_custom_call.1} parent=1 // pred_check
      _
    $region27: #{tpu_custom_call.1} parent=1 // pred_check_branch
      %680 = sbr.rel (0) target = $region29
    $region28: #{tpu_custom_call.1} parent=1 // pred_region
      %681 = dma.done [#allocation4], 512
    $region29: #{tpu_custom_call.1} parent=1 // pred_fallthru
      _
    %682 = vsyncpa [#allocation3], 1
    %683 = vsyncpa [#allocation6], 1
    %684 = vsyncpa [#allocation4], 1

</llo_original>
